<compile_context>
chip_gen: v6e
topology: v6e:2x2x1
jax: 0.10.0
libtpu: 0.0.40
codegen_flags: <defaults>
</compile_context>

<pallas_src>
import jax
import jax.numpy as jnp
from jax.experimental import pallas as pl
from jax.experimental.pallas import tpu as pltpu


# ----------------------------- Pallas kernels --------------------------------

def _fused_heads_kernel(x_ref, wd_ref, bd_ref, wr_ref, br_ref, dec_ref, rgb_ref):
    # x tile: (C, thw)  (channels on sublanes, pixels on lanes)
    x = x_ref[0]
    dec = jnp.dot(wd_ref[...], x, preferred_element_type=jnp.float32)   # (4*out_ch, thw)
    dec_ref[0] = (dec + bd_ref[...]).astype(dec_ref.dtype)
    rgb = jnp.dot(wr_ref[...], x, preferred_element_type=jnp.float32)   # (3, thw)
    rgb_ref[0] = (rgb + br_ref[...]).astype(rgb_ref.dtype)


def _rgb_head_kernel(x_ref, wr_ref, br_ref, rgb_ref):
    rgb = jnp.dot(wr_ref[...], x_ref[0], preferred_element_type=jnp.float32)
    rgb_ref[0] = (rgb + br_ref[...]).astype(rgb_ref.dtype)


# ----------------------------- pallas_call wrappers --------------------------

def _pick_hw_tile(HW, n_batch, thw_max):
    """Lane-dense (multiple-of-128) pixel tile; full extent if HW isn't 128-aligned."""
    if HW % 128 != 0:
        return HW                                  # full-extent lane block (always legal)
    thw = min(max(128, thw_max - thw_max % 128), HW)
    if n_batch == 1 and thw == HW and HW >= 256:
        # ensure >= 2 parallel grid steps so both v7x TensorCores get work
        thw = max(128, (HW // 2) // 128 * 128)
    return thw


_COMPILER_PARAMS = pltpu.CompilerParams(
    dimension_semantics=("parallel", "parallel"),
    vmem_limit_bytes=32 << 20,    # within physical VMEM on v5e/v6e/v7x
)


def fused_heads(x3, w_dec_t, b_dec, w_rgb_t, b_rgb, *, hw_tile=4096):
    """x3: (N, C, HW).  Returns (dec: (N, 4*out_ch, HW), rgb: (N, 3, HW))."""
    N, C, HW = x3.shape
    no_dec = w_dec_t.shape[0]
    thw = _pick_hw_tile(HW, N, hw_tile)
    grid = (N, pl.cdiv(HW, thw))                   # no padding / output slicing needed
    return pl.pallas_call(
        _fused_heads_kernel,
        out_shape=(jax.ShapeDtypeStruct((N, no_dec, HW), x3.dtype),
                   jax.ShapeDtypeStruct((N, 3, HW), x3.dtype)),
        grid=grid,
        in_specs=[
            pl.BlockSpec((1, C, thw), lambda n, j: (n, 0, j)),       # x tile (pipelined)
            pl.BlockSpec((no_dec, C), lambda n, j: (0, 0)),          # deconv weights resident
            pl.BlockSpec((no_dec, 1), lambda n, j: (0, 0)),          # deconv bias resident
            pl.BlockSpec((3, C), lambda n, j: (0, 0)),               # rgb weights resident
            pl.BlockSpec((3, 1), lambda n, j: (0, 0)),               # rgb bias resident
        ],
        out_specs=(
            pl.BlockSpec((1, no_dec, thw), lambda n, j: (n, 0, j)),  # lane-dense 128-row slab
            pl.BlockSpec((1, 3, thw), lambda n, j: (n, 0, j)),
        ),
        compiler_params=_COMPILER_PARAMS,
    )(x3, w_dec_t, b_dec, w_rgb_t, b_rgb)


def rgb_head(x3, w_rgb_t, b_rgb, *, hw_tile=4096):
    """to_rgb only (up=False path).  x3: (N, C, HW) -> (N, 3, HW)."""
    N, C, HW = x3.shape
    thw = _pick_hw_tile(HW, N, hw_tile)
    return pl.pallas_call(
        _rgb_head_kernel,
        out_shape=jax.ShapeDtypeStruct((N, 3, HW), x3.dtype),
        grid=(N, pl.cdiv(HW, thw)),
        in_specs=[pl.BlockSpec((1, C, thw), lambda n, j: (n, 0, j)),
                  pl.BlockSpec((3, C), lambda n, j: (0, 0)),
                  pl.BlockSpec((3, 1), lambda n, j: (0, 0))],
        out_specs=pl.BlockSpec((1, 3, thw), lambda n, j: (n, 0, j)),
        compiler_params=_COMPILER_PARAMS,
    )(x3, w_rgb_t, b_rgb)


# ----------------------------- wrapper glue ----------------------------------

def _nearest_upsample_nchw(rgb, Hr, Wr):
    """F.interpolate(..., mode='nearest') on an NCHW map (pure data movement)."""
    N, C, H, W = rgb.shape
    if Hr % H == 0 and Wr % W == 0:
        rh, rw = Hr // H, Wr // W
        up = jnp.broadcast_to(rgb[:, :, :, None, :, None], (N, C, H, rh, W, rw))
        return up.reshape(N, C, Hr, Wr)
    hi = (jnp.arange(Hr) * H // Hr).astype(jnp.int32)   # PyTorch nearest: floor(dst*in/out)
    wi = (jnp.arange(Wr) * W // Wr).astype(jnp.int32)
    return rgb[:, :, hi][:, :, :, wi]


def rgb_module_forward(x, params, *, resolution=(256, 512), up=True, hw_tile=4096):
    """Forward of RGB_module.  x: [N, C, H, W] -> (x_out, rgb), both NCHW."""
    N, C, H, W = x.shape
    Hr, Wr = resolution
    HW = H * W
    x3 = x.reshape(N, C, HW)      # free reshape: channels stay on sublanes, pixels on lanes

    if up:
        dec_flat, rgb_flat = fused_heads(
            x3, params["deconv_w_t"], params["deconv_b"],
            params["rgb_w_t"], params["rgb_b"], hw_tile=hw_tile)
    else:
        rgb_flat = rgb_head(x3, params["rgb_w_t"], params["rgb_b"], hw_tile=hw_tile)

    rgb = rgb_flat.reshape(N, 3, H, W)          # already channel-major (NCHW)
    rgb = _nearest_upsample_nchw(rgb, Hr, Wr)

    if not up:
        return x, rgb

    # ConvTranspose2d(C, out_ch, 2, 2): pixel-shuffle of the deconv-head rows.
    # TODO(synk): fold this transpose into the kernel epilogue to save one HBM pass.
    out_ch = params["deconv_b"].shape[0] // 4
    dec = dec_flat.reshape(N, out_ch, 2, 2, H, W)                 # (n, o, kh, kw, h, w)
    x_out = jnp.transpose(dec, (0, 1, 4, 2, 5, 3)).reshape(N, out_ch, 2 * H, 2 * W)
    return x_out, rgb


# ----------------------------- deterministic init ----------------------------

def init_params(key, *, in_channel, out_channel, up=True):
    C = in_channel
    k1, k2, k3, k4 = jax.random.split(key, 4)
    # Conv2d(C, 3, 1, 1): weight (3, C, 1, 1), bias (3,)
    rgb_w_torch = 0.05 * jax.random.normal(k1, (3, C, 1, 1), jnp.float32)
    rgb_b_torch = 0.05 * jax.random.normal(k2, (3,), jnp.float32)
    params = {
        "rgb_w_t": rgb_w_torch.reshape(3, C),        # (3, C): row = out channel
        "rgb_b": rgb_b_torch.reshape(3, 1),
        "rgb_w_torch": rgb_w_torch,
        "rgb_b_torch": rgb_b_torch,
    }
    if up:
        # ConvTranspose2d(C, out_ch, 2, 2): weight (C, out_ch, 2, 2), bias (out_ch,)
        dw_torch = 0.05 * jax.random.normal(k3, (C, out_channel, 2, 2), jnp.float32)
        db_torch = 0.05 * jax.random.normal(k4, (out_channel,), jnp.float32)
        # row index = o*4 + kh*2 + kw   (must match the wrapper pixel-shuffle & bias repeat)
        params["deconv_w_t"] = jnp.transpose(dw_torch, (1, 2, 3, 0)).reshape(out_channel * 4, C)
        params["deconv_b"] = jnp.repeat(db_torch, 4).reshape(out_channel * 4, 1)
        params["deconv_w_torch"] = dw_torch
        params["deconv_b_torch"] = db_torch
    return params


# ----------------------------- pure-JAX reference ----------------------------

def _reference_forward(x, params, *, resolution, up=True):
    N, C, H, W = x.shape
    Hr, Wr = resolution
    rgb = jnp.einsum("nchw,rc->nrhw", x, params["rgb_w_t"]) \
        + params["rgb_b"].reshape(1, 3, 1, 1)
    hi = (jnp.arange(Hr) * H // Hr).astype(jnp.int32)
    wi = (jnp.arange(Wr) * W // Wr).astype(jnp.int32)
    rgb = rgb[:, :, hi][:, :, :, wi]
    if not up:
        return x, rgb
    Wt, bt = params["deconv_w_torch"], params["deconv_b_torch"]
    out_ch = Wt.shape[1]
    t = jnp.einsum("nchw,cokl->nohkwl", x, Wt).reshape(N, out_ch, 2 * H, 2 * W)
    return t + bt.reshape(1, out_ch, 1, 1), rgb


# ----------------------------- main ------------------------------------------

if __name__ == "__main__":
    N, C, H, W = 2, 64, 16, 32
    out_ch = 32                      # -> deconv head is exactly 128 lanes-dense rows
    resolution = (64, 128)           # integer 4x/4x nearest upsample; module default (256, 512)

    key = jax.random.PRNGKey(0)
    kx, kp = jax.random.split(key)
    x = jax.random.normal(kx, (N, C, H, W), jnp.float32)
    params = init_params(kp, in_channel=C, out_channel=out_ch, up=True)

    # up=True branch (deconv + to_rgb)
    fwd = jax.jit(lambda xi: rgb_module_forward(xi, params, resolution=resolution, up=True))
    x_out, rgb = fwd(x)
    jax.block_until_ready((x_out, rgb))

    assert x_out.shape == (N, out_ch, 2 * H, 2 * W)
    assert rgb.shape == (N, 3, resolution[0], resolution[1])

    x_ref, rgb_ref = _reference_forward(x, params, resolution=resolution, up=True)
    assert bool(jnp.allclose(x_out, x_ref, atol=2e-3, rtol=2e-3))
    assert bool(jnp.allclose(rgb, rgb_ref, atol=2e-3, rtol=2e-3))

    # up=False branch (to_rgb only; x passes through)
    fwd_noup = jax.jit(lambda xi: rgb_module_forward(xi, params, resolution=resolution, up=False))
    x_same, rgb2 = fwd_noup(x)
    jax.block_until_ready((x_same, rgb2))
    x_ref2, rgb_ref2 = _reference_forward(x, params, resolution=resolution, up=False)
    assert bool(jnp.allclose(x_same, x_ref2))
    assert bool(jnp.allclose(rgb2, rgb_ref2, atol=2e-3, rtol=2e-3))

    print("KERNEL_OK")
</pallas_src>

<mosaic_0001>
module attributes {stable_mosaic.version = 11 : i64} {
  func.func @_fused_heads_kernel(%arg0: i32, %arg1: i32, %arg2: memref<1x64x512xf32, #tpu.memory_space<vmem>>, %arg3: memref<128x64xf32, #tpu.memory_space<vmem>>, %arg4: memref<128x1xf32, #tpu.memory_space<vmem>>, %arg5: memref<3x64xf32, #tpu.memory_space<vmem>>, %arg6: memref<3x1xf32, #tpu.memory_space<vmem>>, %arg7: memref<1x128x512xf32, #tpu.memory_space<vmem>>, %arg8: memref<1x3x512xf32, #tpu.memory_space<vmem>>) attributes {dimension_semantics = [#tpu.dimension_semantics<parallel>, #tpu.dimension_semantics<parallel>], iteration_bounds = array<i64: 2, 1>, scalar_prefetch = 0 : i64, scratch_operands = 0 : i64, tpu.core_type = #tpu.core_type<tc>, window_params = [{transform_indices = @transform_0, window_bounds = array<i64: 1, 64, 512>}, {pipeline_mode = #tpu.pipeline_mode<synchronous>, transform_indices = @transform_1, window_bounds = array<i64: 128, 64>}, {pipeline_mode = #tpu.pipeline_mode<synchronous>, transform_indices = @transform_2, window_bounds = array<i64: 128, 1>}, {pipeline_mode = #tpu.pipeline_mode<synchronous>, transform_indices = @transform_3, window_bounds = array<i64: 3, 64>}, {pipeline_mode = #tpu.pipeline_mode<synchronous>, transform_indices = @transform_4, window_bounds = array<i64: 3, 1>}, {transform_indices = @transform_5, window_bounds = array<i64: 1, 128, 512>}, {transform_indices = @transform_6, window_bounds = array<i64: 1, 3, 512>}]} {
    %c0 = arith.constant 0 : index
    %c0_0 = arith.constant 0 : index
    %c0_1 = arith.constant 0 : index
    %0 = vector.load %arg2[%c0, %c0_0, %c0_1] : memref<1x64x512xf32, #tpu.memory_space<vmem>>, vector<1x64x512xf32>
    %1 = vector.shape_cast %0 : vector<1x64x512xf32> to vector<64x512xf32>
    %c0_2 = arith.constant 0 : index
    %c0_3 = arith.constant 0 : index
    %2 = vector.load %arg3[%c0_2, %c0_3] : memref<128x64xf32, #tpu.memory_space<vmem>>, vector<128x64xf32>
    %cst = arith.constant dense<0.000000e+00> : vector<128x512xf32>
    %3 = tpu.matmul %2, %1, %cst {dimension_numbers = #tpu.dot_dimension_numbers<[1], [0], [0], [1], [0, 0, 1, 1], [], []>} : vector<128x64xf32>, vector<64x512xf32>, vector<128x512xf32> -> vector<128x512xf32>
    %c0_4 = arith.constant 0 : index
    %c0_5 = arith.constant 0 : index
    %4 = vector.load %arg4[%c0_4, %c0_5] : memref<128x1xf32, #tpu.memory_space<vmem>>, vector<128x1xf32>
    %5 = vector.broadcast %4 : vector<128x1xf32> to vector<128x512xf32>
    %6 = arith.addf %3, %5 : vector<128x512xf32>
    %c0_6 = arith.constant 0 : index
    %c0_7 = arith.constant 0 : index
    %c0_8 = arith.constant 0 : index
    %7 = vector.load %arg7[%c0_6, %c0_7, %c0_8] : memref<1x128x512xf32, #tpu.memory_space<vmem>>, vector<1x128x512xf32>
    %8 = vector.shape_cast %7 : vector<1x128x512xf32> to vector<128x512xf32>
    %9 = vector.shape_cast %6 : vector<128x512xf32> to vector<1x128x512xf32>
    tpu.vector_store %arg7[%c0_6, %c0_7, %c0_8], %9 {strides = array<i32>} : memref<1x128x512xf32, #tpu.memory_space<vmem>>, vector<1x128x512xf32>,
    %c0_9 = arith.constant 0 : index
    %c0_10 = arith.constant 0 : index
    %10 = vector.load %arg5[%c0_9, %c0_10] : memref<3x64xf32, #tpu.memory_space<vmem>>, vector<3x64xf32>
    %cst_11 = arith.constant dense<0.000000e+00> : vector<3x512xf32>
    %11 = tpu.matmul %10, %1, %cst_11 {dimension_numbers = #tpu.dot_dimension_numbers<[1], [0], [0], [1], [0, 0, 1, 1], [], []>} : vector<3x64xf32>, vector<64x512xf32>, vector<3x512xf32> -> vector<3x512xf32>
    %c0_12 = arith.constant 0 : index
    %c0_13 = arith.constant 0 : index
    %12 = vector.load %arg6[%c0_12, %c0_13] : memref<3x1xf32, #tpu.memory_space<vmem>>, vector<3x1xf32>
    %13 = vector.broadcast %12 : vector<3x1xf32> to vector<3x512xf32>
    %14 = arith.addf %11, %13 : vector<3x512xf32>
    %c0_14 = arith.constant 0 : index
    %c0_15 = arith.constant 0 : index
    %c0_16 = arith.constant 0 : index
    %15 = vector.load %arg8[%c0_14, %c0_15, %c0_16] : memref<1x3x512xf32, #tpu.memory_space<vmem>>, vector<1x3x512xf32>
    %16 = vector.shape_cast %15 : vector<1x3x512xf32> to vector<3x512xf32>
    %17 = vector.shape_cast %14 : vector<3x512xf32> to vector<1x3x512xf32>
    tpu.vector_store %arg8[%c0_14, %c0_15, %c0_16], %17 {strides = array<i32>} : memref<1x3x512xf32, #tpu.memory_space<vmem>>, vector<1x3x512xf32>,
    return
  }
  func.func @transform_0(%arg0: i32, %arg1: i32) -> (i32, i32, i32) {
    %c0_i32 = arith.constant 0 : i32
    %c0_i32_0 = arith.constant 0 : i32
    return %arg0, %c0_i32, %arg1 : i32, i32, i32
  }
  func.func @transform_1(%arg0: i32, %arg1: i32) -> (i32, i32) {
    %c0_i32 = arith.constant 0 : i32
    %c0_i32_0 = arith.constant 0 : i32
    %c0_i32_1 = arith.constant 0 : i32
    return %c0_i32, %c0_i32_0 : i32, i32
  }
  func.func @transform_2(%arg0: i32, %arg1: i32) -> (i32, i32) {
    %c0_i32 = arith.constant 0 : i32
    %c0_i32_0 = arith.constant 0 : i32
    %c0_i32_1 = arith.constant 0 : i32
    return %c0_i32, %c0_i32_0 : i32, i32
  }
  func.func @transform_3(%arg0: i32, %arg1: i32) -> (i32, i32) {
    %c0_i32 = arith.constant 0 : i32
    %c0_i32_0 = arith.constant 0 : i32
    %c0_i32_1 = arith.constant 0 : i32
    return %c0_i32, %c0_i32_0 : i32, i32
  }
  func.func @transform_4(%arg0: i32, %arg1: i32) -> (i32, i32) {
    %c0_i32 = arith.constant 0 : i32
    %c0_i32_0 = arith.constant 0 : i32
    %c0_i32_1 = arith.constant 0 : i32
    return %c0_i32, %c0_i32_0 : i32, i32
  }
  func.func @transform_5(%arg0: i32, %arg1: i32) -> (i32, i32, i32) {
    %c0_i32 = arith.constant 0 : i32
    %c0_i32_0 = arith.constant 0 : i32
    return %arg0, %c0_i32, %arg1 : i32, i32, i32
  }
  func.func @transform_6(%arg0: i32, %arg1: i32) -> (i32, i32, i32) {
    %c0_i32 = arith.constant 0 : i32
    %c0_i32_0 = arith.constant 0 : i32
    return %arg0, %c0_i32, %arg1 : i32, i32, i32
  }
}

</mosaic_0001>

<llo_original>
// kernel: _lambda_.1
$region0: #{_lambda_.1}
  #allocation0 [shape = 'u32[]', space=smem, size = 0x4, offset = 0x4, fixed_abs, tag = 'smem constant byte address 0x4 - core index']
  #allocation1 [shape = 'u32[144,128]{1,0:T(1,128)}', space=vmem, size = 0x12000, scoped, tag = 'internal scratch']
  %s0 = inlined_call_operand.vmem [shape: f32[2,64,512], index: 0, kind: input, shape index: {}]
  %s1 = inlined_call_operand.hbm [shape: f32[128,64], index: 1, kind: input, shape index: {}]
  %s2 = inlined_call_operand.hbm [shape: f32[128,1], index: 2, kind: input, shape index: {}]
  %s3 = inlined_call_operand.hbm [shape: f32[3,64], index: 3, kind: input, shape index: {}]
  %s4 = inlined_call_operand.hbm [shape: f32[3,1], index: 4, kind: input, shape index: {}]
  %s5 = inlined_call_operand.vmem [shape: f32[2,128,512], index: 5, kind: output, shape index: {0}]
  %s6 = inlined_call_operand.vmem [shape: f32[2,3,512], index: 6, kind: output, shape index: {1}]
  %7 = xla_tuple %s5, %s6
  %s8 = sld [smem:[#allocation0]]
  $region77: #{_lambda_.1} parent=0
    _
  %s10 = ssub.s32 1, %s8
  %s11 = scalar_select 0, %s10, %s8
  $region1: #{_lambda_.1} parent=0
    #allocation2 [shape = 'u8[65536]{0}', space=vmem, size = 0x10000, scoped, tag = 'input window, operand 1, single buffered']
    #allocation3 [shape = 's32[2]{0}', space=sflag, size = 0x8, scoped, tag = 'scoped memory for _lambda_.1']
    #allocation4 [shape = 'u8[65536]{0}', space=vmem, size = 0x10000, scoped, tag = 'input window, operand 2, single buffered']
    #allocation5 [shape = 's32[1]{0}', space=sflag, size = 0x4, scoped, tag = 'scoped memory for _lambda_.1']
    #allocation6 [shape = 'u8[2048]{0}', space=vmem, size = 0x800, scoped, tag = 'input window, operand 3, single buffered']
    #allocation7 [shape = 'u8[2048]{0}', space=vmem, size = 0x800, scoped, tag = 'input window, operand 4, single buffered']
    #allocation8 [shape = 's32[1]{0}', space=sflag, size = 0x4, scoped, tag = 'scoped memory for _lambda_.1']
    %12 = vsyncpa [#allocation3], 0
    %13 = vsyncpa [#allocation5], 0
    %14 = vsyncpa [#allocation8], 0
    loop: start=0, step=1, limit=4
    $region2: #{_lambda_.1} parent=1 // loop_pre_header
      _
    $region3: #{_lambda_.1} parent=1 // loop_header
      %s16 = sphi 0, %s20
      %p17 = scmp.ge.s32.totalorder %s16, 4
      %s23 = sphi 0, %s35
      %s24 = sphi 0, %s31
      %s25 = sphi 0, %s23
      %s26 = sphi 0, %s24
      %s27 = sphi 0, %s25
      %s28 = sphi 0, %s26
      %s40 = sphi 0, %s42
      %s43 = sphi 0, %s40
      %s44 = sphi 0, %s43
      %s60 = sphi 0, %s44
      %s64 = sphi 0, %s64
      %s66 = sphi 0, %s64
      %s67 = sphi 0, %s66
      %s81 = sphi 0, %s67
      %s85 = sphi 0, %s85
      %s87 = sphi 0, %s85
      %s88 = sphi 0, %s87
      %s102 = sphi 0, %s88
      %s106 = sphi 0, %s106
      %s108 = sphi 0, %s106
      %s109 = sphi 0, %s108
      %s123 = sphi 0, %s109
      %s127 = sphi 0, %s127
      %s129 = sphi 0, %s127
      %s130 = sphi 0, %s129
      %s144 = sphi 0, %s130
      %s152 = sphi 0, %s154
      %s155 = sphi 0, %s152
      %s156 = sphi 0, %s155
      %s172 = sphi 0, %s156
      %s180 = sphi 0, %s182
      %s183 = sphi 0, %s180
      %s184 = sphi 0, %s183
      %s200 = sphi 0, %s184
    $region4: #{_lambda_.1} parent=1 // loop_header_branch
      %19 = sbr.rel (%p17) target = $region8
    $region5: #{_lambda_.1} parent=1 // loop_body
      %s21 = ssub.s32 %s16, 1
      %s22 = ssub.s32 %s16, 2
      %s29 = sadd.s32 1, %s24
      %p30 = scmp.ge.s32.totalorder %s29, 1
      %s31 = scalar_select %p30, 0, %s29
      %s32 = sadd.s32 1, %s23
      %s33 = scalar_select %p30, %s32, %s23
      %p34 = scmp.ge.s32.totalorder %s33, 2
      %s35 = scalar_select %p34, 0, %s33
      %s36 = ssub.s32 %s23, %s35
      %s37 = ssub.s32 %s24, %s31
      %s38 = sor.u32 %s36, %s37
      %p39 = scmp.eq.s32.totalorder %s38, 0
      %s41 = sadd.s32 %s40, 1
      %s42 = scalar_select %p39, %s40, %s41
      %p45 = pneg %p39
      %p46 = scmp.eq.s32.totalorder %s16, 1
      %p47 = por %p45, %p46
      %p48 = scmp.ne.s32.totalorder %s40, %s43
      %p49 = scmp.eq.s32.totalorder %s16, 0
      %p50 = por %p48, %p49
      %p51 = scmp.ne.s32.totalorder %s40, %s43
      %p52 = scmp.eq.s32.totalorder %s21, 1
      %p53 = por %p51, %p52
      %p54 = scmp.ne.s32.totalorder %s43, %s44
      %p55 = scmp.eq.s32.totalorder %s21, 0
      %p56 = por %p54, %p55
      %p57 = scmp.ne.s32.totalorder %s43, %s44
      %p58 = scmp.eq.s32.totalorder %s22, 1
      %p59 = por %p57, %p58
      %p61 = scmp.ne.s32.totalorder %s44, %s60
      %p62 = scmp.eq.s32.totalorder %s22, 0
      %p63 = por %p61, %p62
      %s65 = sadd.s32 %s64, 1
      %p68 = scmp.eq.s32.totalorder %s16, 1
      %p69 = scmp.ne.s32.totalorder %s64, %s66
      %p70 = scmp.eq.s32.totalorder %s16, 0
      %p71 = por %p69, %p70
      %p72 = scmp.ne.s32.totalorder %s64, %s66
      %p73 = scmp.eq.s32.totalorder %s21, 1
      %p74 = por %p72, %p73
      %p75 = scmp.ne.s32.totalorder %s66, %s67
      %p76 = scmp.eq.s32.totalorder %s21, 0
      %p77 = por %p75, %p76
      %p78 = scmp.ne.s32.totalorder %s66, %s67
      %p79 = scmp.eq.s32.totalorder %s22, 1
      %p80 = por %p78, %p79
      %p82 = scmp.ne.s32.totalorder %s67, %s81
      %p83 = scmp.eq.s32.totalorder %s22, 0
      %p84 = por %p82, %p83
      %s86 = sadd.s32 %s85, 1
      %p89 = scmp.eq.s32.totalorder %s16, 1
      %p90 = scmp.ne.s32.totalorder %s85, %s87
      %p91 = scmp.eq.s32.totalorder %s16, 0
      %p92 = por %p90, %p91
      %p93 = scmp.ne.s32.totalorder %s85, %s87
      %p94 = scmp.eq.s32.totalorder %s21, 1
      %p95 = por %p93, %p94
      %p96 = scmp.ne.s32.totalorder %s87, %s88
      %p97 = scmp.eq.s32.totalorder %s21, 0
      %p98 = por %p96, %p97
      %p99 = scmp.ne.s32.totalorder %s87, %s88
      %p100 = scmp.eq.s32.totalorder %s22, 1
      %p101 = por %p99, %p100
      %p103 = scmp.ne.s32.totalorder %s88, %s102
      %p104 = scmp.eq.s32.totalorder %s22, 0
      %p105 = por %p103, %p104
      %s107 = sadd.s32 %s106, 1
      %p110 = scmp.eq.s32.totalorder %s16, 1
      %p111 = scmp.ne.s32.totalorder %s106, %s108
      %p112 = scmp.eq.s32.totalorder %s16, 0
      %p113 = por %p111, %p112
      %p114 = scmp.ne.s32.totalorder %s106, %s108
      %p115 = scmp.eq.s32.totalorder %s21, 1
      %p116 = por %p114, %p115
      %p117 = scmp.ne.s32.totalorder %s108, %s109
      %p118 = scmp.eq.s32.totalorder %s21, 0
      %p119 = por %p117, %p118
      %p120 = scmp.ne.s32.totalorder %s108, %s109
      %p121 = scmp.eq.s32.totalorder %s22, 1
      %p122 = por %p120, %p121
      %p124 = scmp.ne.s32.totalorder %s109, %s123
      %p125 = scmp.eq.s32.totalorder %s22, 0
      %p126 = por %p124, %p125
      %s128 = sadd.s32 %s127, 1
      %p131 = scmp.eq.s32.totalorder %s16, 1
      %p132 = scmp.ne.s32.totalorder %s127, %s129
      %p133 = scmp.eq.s32.totalorder %s16, 0
      %p134 = por %p132, %p133
      %p135 = scmp.ne.s32.totalorder %s127, %s129
      %p136 = scmp.eq.s32.totalorder %s21, 1
      %p137 = por %p135, %p136
      %p138 = scmp.ne.s32.totalorder %s129, %s130
      %p139 = scmp.eq.s32.totalorder %s21, 0
      %p140 = por %p138, %p139
      %p141 = scmp.ne.s32.totalorder %s129, %s130
      %p142 = scmp.eq.s32.totalorder %s22, 1
      %p143 = por %p141, %p142
      %p145 = scmp.ne.s32.totalorder %s130, %s144
      %p146 = scmp.eq.s32.totalorder %s22, 0
      %p147 = por %p145, %p146
      %s148 = ssub.s32 %s23, %s35
      %s149 = ssub.s32 %s24, %s31
      %s150 = sor.u32 %s148, %s149
      %p151 = scmp.eq.s32.totalorder %s150, 0
      %s153 = sadd.s32 %s152, 1
      %s154 = scalar_select %p151, %s152, %s153
      %p157 = pneg %p151
      %p158 = scmp.eq.s32.totalorder %s16, 1
      %p159 = por %p157, %p158
      %p160 = scmp.ne.s32.totalorder %s152, %s155
      %p161 = scmp.eq.s32.totalorder %s16, 0
      %p162 = por %p160, %p161
      %p163 = scmp.ne.s32.totalorder %s152, %s155
      %p164 = scmp.eq.s32.totalorder %s21, 1
      %p165 = por %p163, %p164
      %p166 = scmp.ne.s32.totalorder %s155, %s156
      %p167 = scmp.eq.s32.totalorder %s21, 0
      %p168 = por %p166, %p167
      %p169 = scmp.ne.s32.totalorder %s155, %s156
      %p170 = scmp.eq.s32.totalorder %s22, 1
      %p171 = por %p169, %p170
      %p173 = scmp.ne.s32.totalorder %s156, %s172
      %p174 = scmp.eq.s32.totalorder %s22, 0
      %p175 = por %p173, %p174
      %s176 = ssub.s32 %s23, %s35
      %s177 = ssub.s32 %s24, %s31
      %s178 = sor.u32 %s176, %s177
      %p179 = scmp.eq.s32.totalorder %s178, 0
      %s181 = sadd.s32 %s180, 1
      %s182 = scalar_select %p179, %s180, %s181
      %p185 = pneg %p179
      %p186 = scmp.eq.s32.totalorder %s16, 1
      %p187 = por %p185, %p186
      %p188 = scmp.ne.s32.totalorder %s180, %s183
      %p189 = scmp.eq.s32.totalorder %s16, 0
      %p190 = por %p188, %p189
      %p191 = scmp.ne.s32.totalorder %s180, %s183
      %p192 = scmp.eq.s32.totalorder %s21, 1
      %p193 = por %p191, %p192
      %p194 = scmp.ne.s32.totalorder %s183, %s184
      %p195 = scmp.eq.s32.totalorder %s21, 0
      %p196 = por %p194, %p195
      %p197 = scmp.ne.s32.totalorder %s183, %s184
      %p198 = scmp.eq.s32.totalorder %s22, 1
      %p199 = por %p197, %p198
      %p201 = scmp.ne.s32.totalorder %s184, %s200
      %p202 = scmp.eq.s32.totalorder %s22, 0
      %p203 = por %p201, %p202
      %p204 = scmp.le.s32.totalorder 1, %s16
      %p205 = scmp.lt.s32.totalorder %s16, 3
      %p206 = pnand %p204, %p205
      %p207 = pneg %p206
      // Predicated region
      $region9: #{_lambda_.1} parent=5 // pred_check
        _
      $region10: #{_lambda_.1} parent=5 // pred_check_branch
        %209 = sbr.rel (%p206) target = $region12
      $region11: #{_lambda_.1} parent=5 // pred_region
        %s210 = ssub.s32 %s16, 1
        // Predicated region
        $region13: #{_lambda_.1} parent=11 // pred_check
          %p211 = pneg %p77
        $region14: #{_lambda_.1} parent=11 // pred_check_branch
          %213 = sbr.rel (%p211) target = $region16
        $region15: #{_lambda_.1} parent=11 // pred_region
          %s215 = ssub.s32 2048, 2048
          %216 = vsyncadd [#allocation3], %s215
          %s217 = sshll.u32 [#allocation2], 4
          %s218 = int_to_ptr.vmem [resolvable:$true] %s217
          %223 = dma.hbm_to_vmem [thread:$0]  %s1, 2048, %s218, [#allocation3], 128, 128, 8
        $region16: #{_lambda_.1} parent=11 // pred_fallthru
          _
        // Predicated region
        $region17: #{_lambda_.1} parent=11 // pred_check
          %p224 = pneg %p98
        $region18: #{_lambda_.1} parent=11 // pred_check_branch
          %226 = sbr.rel (%p224) target = $region20
        $region19: #{_lambda_.1} parent=11 // pred_region
          %s228 = ssub.s32 2048, 2048
          %229 = vsyncadd [#allocation5], %s228
          %s230 = sshll.u32 [#allocation4], 4
          %s231 = int_to_ptr.vmem [resolvable:$true] %s230
          %236 = dma.hbm_to_vmem [thread:$0]  %s2, 2048, %s231, [#allocation5], 128, 128, 8
        $region20: #{_lambda_.1} parent=11 // pred_fallthru
          _
        // Predicated region
        $region21: #{_lambda_.1} parent=11 // pred_check
          %p237 = pneg %p119
        $region22: #{_lambda_.1} parent=11 // pred_check_branch
          %239 = sbr.rel (%p237) target = $region24
        $region23: #{_lambda_.1} parent=11 // pred_region
          %s241 = ssub.s32 64, 64
          %242 = vsyncadd [#allocation5], %s241
          %s244 = sshll.u32 [#allocation6], 4
          %s245 = int_to_ptr.vmem [resolvable:$true] %s244
          %247 = dma.hbm_to_vmem [thread:$0]  %s3, 64, %s245, [#allocation5]
        $region24: #{_lambda_.1} parent=11 // pred_fallthru
          _
        // Predicated region
        $region25: #{_lambda_.1} parent=11 // pred_check
          %p248 = pneg %p140
        $region26: #{_lambda_.1} parent=11 // pred_check_branch
          %250 = sbr.rel (%p248) target = $region28
        $region27: #{_lambda_.1} parent=11 // pred_region
          %s252 = ssub.s32 64, 64
          %253 = vsyncadd [#allocation8], %s252
          %s255 = sshll.u32 [#allocation7], 4
          %s256 = int_to_ptr.vmem [resolvable:$true] %s255
          %258 = dma.hbm_to_vmem [thread:$0]  %s4, 64, %s256, [#allocation8]
        $region28: #{_lambda_.1} parent=11 // pred_fallthru
          _
      $region12: #{_lambda_.1} parent=5 // pred_fallthru
        _
      %p259 = scmp.lt.s32.totalorder %s16, 2
      // Predicated region
      $region29: #{_lambda_.1} parent=5 // pred_check
        %p260 = pneg %p259
      $region30: #{_lambda_.1} parent=5 // pred_check_branch
        %262 = sbr.rel (%p260) target = $region32
      $region31: #{_lambda_.1} parent=5 // pred_region
        // Predicated region
        $region33: #{_lambda_.1} parent=31 // pred_check
          %p263 = pneg %p50
        $region34: #{_lambda_.1} parent=31 // pred_check_branch
          %265 = sbr.rel (%p263) target = $region36
        $region35: #{_lambda_.1} parent=31 // pred_region
          %s266 = smul.u32 4, %s24
          %p267 = scmp.lt.s32.totalorder %s23, 1
          %s268 = scalar_select %p267, %s23, 1
          %p269 = scmp.lt.s32.totalorder %s266, 3
          %s270 = scalar_select %p269, %s266, 3
          %s271 = smul.addr %s268, 32
          %s272 = sadd.s32 %s270, %s271
          %s273 = smul.addr %s272, 8
          %s274 = scalar_lea.vmem %s0, %s273
          %s275 = smul.u32 4, %s24
        $region36: #{_lambda_.1} parent=31 // pred_fallthru
          _
      $region32: #{_lambda_.1} parent=5 // pred_fallthru
        _
      %p276 = scmp.le.s32.totalorder 1, %s16
      %p277 = scmp.lt.s32.totalorder %s16, 3
      %p278 = pnand %p276, %p277
      %p279 = pneg %p278
      // Predicated region
      $region37: #{_lambda_.1} parent=5 // pred_check
        _
      $region38: #{_lambda_.1} parent=5 // pred_check_branch
        %281 = sbr.rel (%p278) target = $region40
      $region39: #{_lambda_.1} parent=5 // pred_region
        %s282 = ssub.s32 %s16, 1
        // Predicated region
        $region41: #{_lambda_.1} parent=39 // pred_check
          %p283 = pneg %p77
        $region42: #{_lambda_.1} parent=39 // pred_check_branch
          %285 = sbr.rel (%p283) target = $region44
        $region43: #{_lambda_.1} parent=39 // pred_region
          %286 = dma.done [#allocation3], 2048
        $region44: #{_lambda_.1} parent=39 // pred_fallthru
          _
        // Predicated region
        $region45: #{_lambda_.1} parent=39 // pred_check
          %p287 = pneg %p98
        $region46: #{_lambda_.1} parent=39 // pred_check_branch
          %289 = sbr.rel (%p287) target = $region48
        $region47: #{_lambda_.1} parent=39 // pred_region
          %290 = dma.done [#allocation5], 2048
        $region48: #{_lambda_.1} parent=39 // pred_fallthru
          _
        // Predicated region
        $region49: #{_lambda_.1} parent=39 // pred_check
          %p291 = pneg %p119
        $region50: #{_lambda_.1} parent=39 // pred_check_branch
          %293 = sbr.rel (%p291) target = $region52
        $region51: #{_lambda_.1} parent=39 // pred_region
          %294 = dma.done [#allocation5], 64
        $region52: #{_lambda_.1} parent=39 // pred_fallthru
          _
        // Predicated region
        $region53: #{_lambda_.1} parent=39 // pred_check
          %p295 = pneg %p140
        $region54: #{_lambda_.1} parent=39 // pred_check_branch
          %297 = sbr.rel (%p295) target = $region56
        $region55: #{_lambda_.1} parent=39 // pred_region
          %298 = dma.done [#allocation8], 64
        $region56: #{_lambda_.1} parent=39 // pred_fallthru
          _
        %s299 = smul.u32 4, %s26
        %p300 = scmp.lt.s32.totalorder %s25, 1
        %s301 = scalar_select %p300, %s25, 1
        %p302 = scmp.lt.s32.totalorder %s299, 3
        %s303 = scalar_select %p302, %s299, 3
        %s304 = smul.addr %s301, 32
        %s305 = sadd.s32 %s303, %s304
        %s306 = smul.addr %s305, 8
        %s307 = scalar_lea.vmem %s0, %s306
        %p308 = pneg %p56
        %p309 = pneg %p53
        %p310 = pneg %p77
        %p311 = pneg %p74
        %p312 = pneg %p98
        %p313 = pneg %p95
        %p314 = pneg %p119
        %p315 = pneg %p116
        %p316 = pneg %p140
        %p317 = pneg %p137
        %p318 = pneg %p168
        %p319 = pneg %p165
        %s320 = smul.u32 4, %s26
        %p321 = scmp.lt.s32.totalorder %s25, 1
        %s322 = scalar_select %p321, %s25, 1
        %p323 = scmp.lt.s32.totalorder %s320, 3
        %s324 = scalar_select %p323, %s320, 3
        %s325 = smul.addr %s322, 64
        %s326 = sadd.s32 %s324, %s325
        %s327 = smul.addr %s326, 8
        %s328 = scalar_lea.vmem %s5, %s327
        %p329 = pneg %p196
        %p330 = pneg %p193
        %s331 = smul.u32 4, %s26
        %p332 = scmp.lt.s32.totalorder %s25, 1
        %s333 = scalar_select %p332, %s25, 1
        %p334 = scmp.lt.s32.totalorder %s331, 3
        %s335 = scalar_select %p334, %s331, 3
        %s336 = smul.addr %s333, 4
        %s337 = sadd.s32 %s335, %s336
        %s338 = smul.addr %s337, 4
        %s339 = scalar_lea.vmem %s6, %s338
        %s340 = smul.u32 4, %s26
        %p341 = scmp.lt.s32.totalorder %s25, 1
        %s342 = scalar_select %p341, %s25, 1
        %p343 = scmp.lt.s32.totalorder %s340, 3
        %s344 = scalar_select %p343, %s340, 3
        %s345 = smul.addr %s342, 32
        %s346 = sadd.s32 %s344, %s345
        %s347 = smul.addr %s346, 8
        %s348 = scalar_lea.vmem %s0, %s347
        %s349 = smul.u32 4, %s26
        %s350 = smul.u32 4, %s26
        %p351 = scmp.lt.s32.totalorder %s25, 1
        %s352 = scalar_select %p351, %s25, 1
        %p353 = scmp.lt.s32.totalorder %s350, 3
        %s354 = scalar_select %p353, %s350, 3
        %s355 = smul.addr %s352, 64
        %s356 = sadd.s32 %s354, %s355
        %s357 = smul.addr %s356, 8
        %s358 = scalar_lea.vmem %s5, %s357
        %s359 = smul.u32 4, %s26
        %s360 = smul.u32 4, %s26
        %p361 = scmp.lt.s32.totalorder %s25, 1
        %s362 = scalar_select %p361, %s25, 1
        %p363 = scmp.lt.s32.totalorder %s360, 3
        %s364 = scalar_select %p363, %s360, 3
        %s365 = smul.addr %s362, 4
        %s366 = sadd.s32 %s364, %s365
        %s367 = smul.addr %s366, 4
        %s368 = scalar_lea.vmem %s6, %s367
        %s369 = smul.u32 4, %s26
        %v370 = vld [vmem:[%s348] sm:$0xff]
        %v371 = vld [vmem:[%s348 + $0x8] sm:$0xff]
        %v372 = vld [vmem:[%s348 + $0x10] sm:$0xff]
        %v373 = vld [vmem:[%s348 + $0x18] sm:$0xff]
        %v374 = vld [vmem:[%s348 + $0x20] sm:$0xff]
        %v375 = vld [vmem:[%s348 + $0x28] sm:$0xff]
        %v376 = vld [vmem:[%s348 + $0x30] sm:$0xff]
        %v377 = vld [vmem:[%s348 + $0x38] sm:$0xff]
        %v378 = vld [vmem:[%s348 + $0x40] sm:$0xff]
        %v379 = vld [vmem:[%s348 + $0x48] sm:$0xff]
        %v380 = vld [vmem:[%s348 + $0x50] sm:$0xff]
        %v381 = vld [vmem:[%s348 + $0x58] sm:$0xff]
        %v382 = vld [vmem:[%s348 + $0x60] sm:$0xff]
        %v383 = vld [vmem:[%s348 + $0x68] sm:$0xff]
        %v384 = vld [vmem:[%s348 + $0x70] sm:$0xff]
        %v385 = vld [vmem:[%s348 + $0x78] sm:$0xff]
        %v386 = vld [vmem:[%s348 + $0x80] sm:$0xff]
        %v387 = vld [vmem:[%s348 + $0x88] sm:$0xff]
        %v388 = vld [vmem:[%s348 + $0x90] sm:$0xff]
        %v389 = vld [vmem:[%s348 + $0x98] sm:$0xff]
        %v390 = vld [vmem:[%s348 + $0xa0] sm:$0xff]
        %v391 = vld [vmem:[%s348 + $0xa8] sm:$0xff]
        %v392 = vld [vmem:[%s348 + $0xb0] sm:$0xff]
        %v393 = vld [vmem:[%s348 + $0xb8] sm:$0xff]
        %v394 = vld [vmem:[%s348 + $0xc0] sm:$0xff]
        %v395 = vld [vmem:[%s348 + $0xc8] sm:$0xff]
        %v396 = vld [vmem:[%s348 + $0xd0] sm:$0xff]
        %v397 = vld [vmem:[%s348 + $0xd8] sm:$0xff]
        %v398 = vld [vmem:[%s348 + $0xe0] sm:$0xff]
        %v399 = vld [vmem:[%s348 + $0xe8] sm:$0xff]
        %v400 = vld [vmem:[%s348 + $0xf0] sm:$0xff]
        %v401 = vld [vmem:[%s348 + $0xf8] sm:$0xff]
        %v402 = vld [vmem:[#allocation2] sm:$0xff]
        %v403 = vld [vmem:[#allocation2 + $0x8] sm:$0xff]
        %v404 = vld [vmem:[#allocation2 + $0x10] sm:$0xff]
        %v405 = vld [vmem:[#allocation2 + $0x18] sm:$0xff]
        %v406 = vld [vmem:[#allocation2 + $0x20] sm:$0xff]
        %v407 = vld [vmem:[#allocation2 + $0x28] sm:$0xff]
        %v408 = vld [vmem:[#allocation2 + $0x30] sm:$0xff]
        %v409 = vld [vmem:[#allocation2 + $0x38] sm:$0xff]
        %v410 = vld [vmem:[#allocation2 + $0x40] sm:$0xff]
        %v411 = vld [vmem:[#allocation2 + $0x48] sm:$0xff]
        %v412 = vld [vmem:[#allocation2 + $0x50] sm:$0xff]
        %v413 = vld [vmem:[#allocation2 + $0x58] sm:$0xff]
        %v414 = vld [vmem:[#allocation2 + $0x60] sm:$0xff]
        %v415 = vld [vmem:[#allocation2 + $0x68] sm:$0xff]
        %v416 = vld [vmem:[#allocation2 + $0x70] sm:$0xff]
        %v417 = vld [vmem:[#allocation2 + $0x78] sm:$0xff]
        %v418 = vld [vmem:[#allocation4] sm:$0xff]
        %v419 = vld [vmem:[#allocation4 + $0x8] sm:$0xff]
        %v420 = vld [vmem:[#allocation4 + $0x10] sm:$0xff]
        %v421 = vld [vmem:[#allocation4 + $0x18] sm:$0xff]
        %v422 = vld [vmem:[#allocation4 + $0x20] sm:$0xff]
        %v423 = vld [vmem:[#allocation4 + $0x28] sm:$0xff]
        %v424 = vld [vmem:[#allocation4 + $0x30] sm:$0xff]
        %v425 = vld [vmem:[#allocation4 + $0x38] sm:$0xff]
        %v426 = vld [vmem:[#allocation4 + $0x40] sm:$0xff]
        %v427 = vld [vmem:[#allocation4 + $0x48] sm:$0xff]
        %v428 = vld [vmem:[#allocation4 + $0x50] sm:$0xff]
        %v429 = vld [vmem:[#allocation4 + $0x58] sm:$0xff]
        %v430 = vld [vmem:[#allocation4 + $0x60] sm:$0xff]
        %v431 = vld [vmem:[#allocation4 + $0x68] sm:$0xff]
        %v432 = vld [vmem:[#allocation4 + $0x70] sm:$0xff]
        %v433 = vld [vmem:[#allocation4 + $0x78] sm:$0xff]
        %435 = vset.pattern.permute.xlu0 0
        %436 = vperm.xlu0 %435, %v418
        %v437 = vpop.permute.xlu0 %436
        %440 = vset.pattern.permute.xlu0 0
        %441 = vperm.xlu0 %440, %v419
        %v442 = vpop.permute.xlu0 %441
        %445 = vset.pattern.permute.xlu0 0
        %446 = vperm.xlu0 %445, %v420
        %v447 = vpop.permute.xlu0 %446
        %450 = vset.pattern.permute.xlu0 0
        %451 = vperm.xlu0 %450, %v421
        %v452 = vpop.permute.xlu0 %451
        %455 = vset.pattern.permute.xlu0 0
        %456 = vperm.xlu0 %455, %v422
        %v457 = vpop.permute.xlu0 %456
        %460 = vset.pattern.permute.xlu0 0
        %461 = vperm.xlu0 %460, %v423
        %v462 = vpop.permute.xlu0 %461
        %465 = vset.pattern.permute.xlu0 0
        %466 = vperm.xlu0 %465, %v424
        %v467 = vpop.permute.xlu0 %466
        %470 = vset.pattern.permute.xlu0 0
        %471 = vperm.xlu0 %470, %v425
        %v472 = vpop.permute.xlu0 %471
        %475 = vset.pattern.permute.xlu0 0
        %476 = vperm.xlu0 %475, %v426
        %v477 = vpop.permute.xlu0 %476
        %480 = vset.pattern.permute.xlu0 0
        %481 = vperm.xlu0 %480, %v427
        %v482 = vpop.permute.xlu0 %481
        %485 = vset.pattern.permute.xlu0 0
        %486 = vperm.xlu0 %485, %v428
        %v487 = vpop.permute.xlu0 %486
        %490 = vset.pattern.permute.xlu0 0
        %491 = vperm.xlu0 %490, %v429
        %v492 = vpop.permute.xlu0 %491
        %495 = vset.pattern.permute.xlu0 0
        %496 = vperm.xlu0 %495, %v430
        %v497 = vpop.permute.xlu0 %496
        %500 = vset.pattern.permute.xlu0 0
        %501 = vperm.xlu0 %500, %v431
        %v502 = vpop.permute.xlu0 %501
        %505 = vset.pattern.permute.xlu0 0
        %506 = vperm.xlu0 %505, %v432
        %v507 = vpop.permute.xlu0 %506
        %510 = vset.pattern.permute.xlu0 0
        %511 = vperm.xlu0 %510, %v433
        %v512 = vpop.permute.xlu0 %511
        %vm514 = vcmask 523264
        %v516 = vsel %vm514, %v402, 0
        %v519 = vsel %vm514, %v403, 0
        %v522 = vsel %vm514, %v404, 0
        %v525 = vsel %vm514, %v405, 0
        %v528 = vsel %vm514, %v406, 0
        %v531 = vsel %vm514, %v407, 0
        %v534 = vsel %vm514, %v408, 0
        %v537 = vsel %vm514, %v409, 0
        %v540 = vsel %vm514, %v410, 0
        %v543 = vsel %vm514, %v411, 0
        %v546 = vsel %vm514, %v412, 0
        %v549 = vsel %vm514, %v413, 0
        %v552 = vsel %vm514, %v414, 0
        %v555 = vsel %vm514, %v415, 0
        %v558 = vsel %vm514, %v416, 0
        %v561 = vsel %vm514, %v417, 0
        %563 = vmatprep.subr.mxu0 0.0
        %564 = vmatpush1.msra.mxu0 0.0
        %565 = vmatprep.subr.mxu0 0.0
        %566 = vmatpush1.msra.mxu0 0.0
        %567 = vmatprep.subr.mxu0 0.0
        %568 = vmatpush1.msra.mxu0 0.0
        %569 = vmatprep.subr.mxu0 0.0
        %570 = vmatpush1.msra.mxu0 0.0
        %571 = vmatprep.subr.mxu0 0.0
        %572 = vmatpush1.msra.mxu0 0.0
        %573 = vmatprep.subr.mxu0 0.0
        %574 = vmatpush1.msra.mxu0 0.0
        %575 = vmatprep.subr.mxu0 0.0
        %576 = vmatpush1.msra.mxu0 0.0
        %577 = vmatprep.subr.mxu0 0.0
        %578 = vmatpush1.msra.mxu0 0.0
        %579 = vmatprep.subr.mxu0 %v399
        %580 = vmatpush1.msra.mxu0 %v398
        %581 = vmatprep.subr.mxu0 %v395
        %582 = vmatpush1.msra.mxu0 %v394
        %583 = vmatprep.subr.mxu0 %v391
        %584 = vmatpush1.msra.mxu0 %v390
        %585 = vmatprep.subr.mxu0 %v387
        %586 = vmatpush1.msra.mxu0 %v386
        %587 = vmatprep.subr.mxu0 %v383
        %588 = vmatpush1.msra.mxu0 %v382
        %589 = vmatprep.subr.mxu0 %v379
        %590 = vmatpush1.msra.mxu0 %v378
        %591 = vmatprep.subr.mxu0 %v375
        %592 = vmatpush1.msra.mxu0 %v374
        %593 = vmatprep.subr.mxu0 %v371
        %594 = vmatpush1.msra.mxu0 %v370
        %595 = vmatprep.subr.mxu0 0.0
        %596 = vmatpush2.msra.mxu0 0.0
        %597 = vmatprep.subr.mxu0 0.0
        %598 = vmatpush2.msra.mxu0 0.0
        %599 = vmatprep.subr.mxu0 0.0
        %600 = vmatpush2.msra.mxu0 0.0
        %601 = vmatprep.subr.mxu0 0.0
        %602 = vmatpush2.msra.mxu0 0.0
        %603 = vmatprep.subr.mxu0 0.0
        %604 = vmatpush2.msra.mxu0 0.0
        %605 = vmatprep.subr.mxu0 0.0
        %606 = vmatpush2.msra.mxu0 0.0
        %607 = vmatprep.subr.mxu0 0.0
        %608 = vmatpush2.msra.mxu0 0.0
        %609 = vmatprep.subr.mxu0 0.0
        %610 = vmatpush2.msra.mxu0 0.0
        %611 = vmatprep.subr.mxu0 0.0
        %612 = vmatpush2.msra.mxu0 0.0
        %613 = vmatprep.subr.mxu0 0.0
        %614 = vmatpush2.msra.mxu0 0.0
        %615 = vmatprep.subr.mxu0 0.0
        %616 = vmatpush2.msra.mxu0 0.0
        %617 = vmatprep.subr.mxu0 0.0
        %618 = vmatpush2.msra.mxu0 0.0
        %619 = vmatprep.subr.mxu0 0.0
        %620 = vmatpush2.msra.mxu0 0.0
        %621 = vmatprep.subr.mxu0 0.0
        %622 = vmatpush2.msra.mxu0 0.0
        %623 = vmatprep.subr.mxu0 0.0
        %624 = vmatpush2.msra.mxu0 0.0
        %625 = vmatprep.subr.mxu0 0.0
        %626 = vmatpush2.msra.mxu0 0.0
        %627 = vmatprep.mubr.f32.mxu0 0.0
        %628 = vmatmul.mubr.f32.gmra.mxu0 %v516
        %v629 = vpop.f32.mrf.mxu0
        %v630 = vadd.f32 %v437, %v629
        %v631 = vpop.f32.mrf.mxu0
        %v632 = vadd.f32 %v437, %v631
        %633 = vmatprep.mubr.f32.mxu0 0.0
        %634 = vmatmul.mubr.f32.gmra.mxu0 %v519
        %v635 = vpop.f32.mrf.mxu0
        %v636 = vadd.f32 %v442, %v635
        %v637 = vpop.f32.mrf.mxu0
        %v638 = vadd.f32 %v442, %v637
        %639 = vmatprep.mubr.f32.mxu0 0.0
        %640 = vmatmul.mubr.f32.gmra.mxu0 %v522
        %v641 = vpop.f32.mrf.mxu0
        %v642 = vadd.f32 %v447, %v641
        %v643 = vpop.f32.mrf.mxu0
        %v644 = vadd.f32 %v447, %v643
        %645 = vmatprep.mubr.f32.mxu0 0.0
        %646 = vmatmul.mubr.f32.gmra.mxu0 %v525
        %v647 = vpop.f32.mrf.mxu0
        %v648 = vadd.f32 %v452, %v647
        %v649 = vpop.f32.mrf.mxu0
        %v650 = vadd.f32 %v452, %v649
        %651 = vmatprep.mubr.f32.mxu0 0.0
        %652 = vmatmul.mubr.f32.gmra.mxu0 %v528
        %v653 = vpop.f32.mrf.mxu0
        %v654 = vadd.f32 %v457, %v653
        %v655 = vpop.f32.mrf.mxu0
        %v656 = vadd.f32 %v457, %v655
        %657 = vmatprep.mubr.f32.mxu0 0.0
        %658 = vmatmul.mubr.f32.gmra.mxu0 %v531
        %v659 = vpop.f32.mrf.mxu0
        %v660 = vadd.f32 %v462, %v659
        %v661 = vpop.f32.mrf.mxu0
        %v662 = vadd.f32 %v462, %v661
        %663 = vmatprep.mubr.f32.mxu0 0.0
        %664 = vmatmul.mubr.f32.gmra.mxu0 %v534
        %v665 = vpop.f32.mrf.mxu0
        %v666 = vadd.f32 %v467, %v665
        %v667 = vpop.f32.mrf.mxu0
        %v668 = vadd.f32 %v467, %v667
        %669 = vmatprep.mubr.f32.mxu0 0.0
        %670 = vmatmul.mubr.f32.gmra.mxu0 %v537
        %v671 = vpop.f32.mrf.mxu0
        %v672 = vadd.f32 %v472, %v671
        %v673 = vpop.f32.mrf.mxu0
        %v674 = vadd.f32 %v472, %v673
        %675 = vmatprep.mubr.f32.mxu0 0.0
        %676 = vmatmul.mubr.f32.gmra.mxu0 %v540
        %v677 = vpop.f32.mrf.mxu0
        %v678 = vadd.f32 %v477, %v677
        %v679 = vpop.f32.mrf.mxu0
        %v680 = vadd.f32 %v477, %v679
        %681 = vmatprep.mubr.f32.mxu0 0.0
        %682 = vmatmul.mubr.f32.gmra.mxu0 %v543
        %v683 = vpop.f32.mrf.mxu0
        %v684 = vadd.f32 %v482, %v683
        %v685 = vpop.f32.mrf.mxu0
        %v686 = vadd.f32 %v482, %v685
        %687 = vmatprep.mubr.f32.mxu0 0.0
        %688 = vmatmul.mubr.f32.gmra.mxu0 %v546
        %v689 = vpop.f32.mrf.mxu0
        %v690 = vadd.f32 %v487, %v689
        %v691 = vpop.f32.mrf.mxu0
        %v692 = vadd.f32 %v487, %v691
        %693 = vmatprep.mubr.f32.mxu0 0.0
        %694 = vmatmul.mubr.f32.gmra.mxu0 %v549
        %v695 = vpop.f32.mrf.mxu0
        %v696 = vadd.f32 %v492, %v695
        %v697 = vpop.f32.mrf.mxu0
        %v698 = vadd.f32 %v492, %v697
        %699 = vmatprep.mubr.f32.mxu0 0.0
        %700 = vmatmul.mubr.f32.gmra.mxu0 %v552
        %v701 = vpop.f32.mrf.mxu0
        %v702 = vadd.f32 %v497, %v701
        %v703 = vpop.f32.mrf.mxu0
        %v704 = vadd.f32 %v497, %v703
        %705 = vmatprep.mubr.f32.mxu0 0.0
        %706 = vmatmul.mubr.f32.gmra.mxu0 %v555
        %v707 = vpop.f32.mrf.mxu0
        %v708 = vadd.f32 %v502, %v707
        %v709 = vpop.f32.mrf.mxu0
        %v710 = vadd.f32 %v502, %v709
        %711 = vmatprep.mubr.f32.mxu0 0.0
        %712 = vmatmul.mubr.f32.gmra.mxu0 %v558
        %v713 = vpop.f32.mrf.mxu0
        %v714 = vadd.f32 %v507, %v713
        %v715 = vpop.f32.mrf.mxu0
        %v716 = vadd.f32 %v507, %v715
        %717 = vmatprep.mubr.f32.mxu0 0.0
        %718 = vmatmul.mubr.f32.gmra.mxu0 %v561
        %v719 = vpop.f32.mrf.mxu0
        %v720 = vadd.f32 %v512, %v719
        %v721 = vpop.f32.mrf.mxu0
        %v722 = vadd.f32 %v512, %v721
        %723 = vdwg.mxu0
        %724 = vmatprep.subr.mxu0 0.0
        %725 = vmatpush1.msra.mxu0 0.0
        %726 = vmatprep.subr.mxu0 0.0
        %727 = vmatpush1.msra.mxu0 0.0
        %728 = vmatprep.subr.mxu0 0.0
        %729 = vmatpush1.msra.mxu0 0.0
        %730 = vmatprep.subr.mxu0 0.0
        %731 = vmatpush1.msra.mxu0 0.0
        %732 = vmatprep.subr.mxu0 0.0
        %733 = vmatpush1.msra.mxu0 0.0
        %734 = vmatprep.subr.mxu0 0.0
        %735 = vmatpush1.msra.mxu0 0.0
        %736 = vmatprep.subr.mxu0 0.0
        %737 = vmatpush1.msra.mxu0 0.0
        %738 = vmatprep.subr.mxu0 0.0
        %739 = vmatpush1.msra.mxu0 0.0
        %740 = vmatprep.subr.mxu0 %v401
        %741 = vmatpush1.msra.mxu0 %v400
        %742 = vmatprep.subr.mxu0 %v397
        %743 = vmatpush1.msra.mxu0 %v396
        %744 = vmatprep.subr.mxu0 %v393
        %745 = vmatpush1.msra.mxu0 %v392
        %746 = vmatprep.subr.mxu0 %v389
        %747 = vmatpush1.msra.mxu0 %v388
        %748 = vmatprep.subr.mxu0 %v385
        %749 = vmatpush1.msra.mxu0 %v384
        %750 = vmatprep.subr.mxu0 %v381
        %751 = vmatpush1.msra.mxu0 %v380
        %752 = vmatprep.subr.mxu0 %v377
        %753 = vmatpush1.msra.mxu0 %v376
        %754 = vmatprep.subr.mxu0 %v373
        %755 = vmatpush1.msra.mxu0 %v372
        %756 = vmatprep.subr.mxu0 0.0
        %757 = vmatpush2.msra.mxu0 0.0
        %758 = vmatprep.subr.mxu0 0.0
        %759 = vmatpush2.msra.mxu0 0.0
        %760 = vmatprep.subr.mxu0 0.0
        %761 = vmatpush2.msra.mxu0 0.0
        %762 = vmatprep.subr.mxu0 0.0
        %763 = vmatpush2.msra.mxu0 0.0
        %764 = vmatprep.subr.mxu0 0.0
        %765 = vmatpush2.msra.mxu0 0.0
        %766 = vmatprep.subr.mxu0 0.0
        %767 = vmatpush2.msra.mxu0 0.0
        %768 = vmatprep.subr.mxu0 0.0
        %769 = vmatpush2.msra.mxu0 0.0
        %770 = vmatprep.subr.mxu0 0.0
        %771 = vmatpush2.msra.mxu0 0.0
        %772 = vmatprep.subr.mxu0 0.0
        %773 = vmatpush2.msra.mxu0 0.0
        %774 = vmatprep.subr.mxu0 0.0
        %775 = vmatpush2.msra.mxu0 0.0
        %776 = vmatprep.subr.mxu0 0.0
        %777 = vmatpush2.msra.mxu0 0.0
        %778 = vmatprep.subr.mxu0 0.0
        %779 = vmatpush2.msra.mxu0 0.0
        %780 = vmatprep.subr.mxu0 0.0
        %781 = vmatpush2.msra.mxu0 0.0
        %782 = vmatprep.subr.mxu0 0.0
        %783 = vmatpush2.msra.mxu0 0.0
        %784 = vmatprep.subr.mxu0 0.0
        %785 = vmatpush2.msra.mxu0 0.0
        %786 = vmatprep.subr.mxu0 0.0
        %787 = vmatpush2.msra.mxu0 0.0
        %788 = vmatprep.mubr.f32.mxu0 0.0
        %789 = vmatmul.mubr.f32.gmra.mxu0 %v516
        %v790 = vpop.f32.mrf.mxu0
        %v791 = vadd.f32 %v437, %v790
        %v792 = vpop.f32.mrf.mxu0
        %v793 = vadd.f32 %v437, %v792
        %794 = vmatprep.mubr.f32.mxu0 0.0
        %795 = vmatmul.mubr.f32.gmra.mxu0 %v519
        %v796 = vpop.f32.mrf.mxu0
        %v797 = vadd.f32 %v442, %v796
        %v798 = vpop.f32.mrf.mxu0
        %v799 = vadd.f32 %v442, %v798
        %800 = vmatprep.mubr.f32.mxu0 0.0
        %801 = vmatmul.mubr.f32.gmra.mxu0 %v522
        %v802 = vpop.f32.mrf.mxu0
        %v803 = vadd.f32 %v447, %v802
        %v804 = vpop.f32.mrf.mxu0
        %v805 = vadd.f32 %v447, %v804
        %806 = vmatprep.mubr.f32.mxu0 0.0
        %807 = vmatmul.mubr.f32.gmra.mxu0 %v525
        %v808 = vpop.f32.mrf.mxu0
        %v809 = vadd.f32 %v452, %v808
        %v810 = vpop.f32.mrf.mxu0
        %v811 = vadd.f32 %v452, %v810
        %812 = vmatprep.mubr.f32.mxu0 0.0
        %813 = vmatmul.mubr.f32.gmra.mxu0 %v528
        %v814 = vpop.f32.mrf.mxu0
        %v815 = vadd.f32 %v457, %v814
        %v816 = vpop.f32.mrf.mxu0
        %v817 = vadd.f32 %v457, %v816
        %818 = vmatprep.mubr.f32.mxu0 0.0
        %819 = vmatmul.mubr.f32.gmra.mxu0 %v531
        %v820 = vpop.f32.mrf.mxu0
        %v821 = vadd.f32 %v462, %v820
        %v822 = vpop.f32.mrf.mxu0
        %v823 = vadd.f32 %v462, %v822
        %824 = vmatprep.mubr.f32.mxu0 0.0
        %825 = vmatmul.mubr.f32.gmra.mxu0 %v534
        %v826 = vpop.f32.mrf.mxu0
        %v827 = vadd.f32 %v467, %v826
        %v828 = vpop.f32.mrf.mxu0
        %v829 = vadd.f32 %v467, %v828
        %830 = vmatprep.mubr.f32.mxu0 0.0
        %831 = vmatmul.mubr.f32.gmra.mxu0 %v537
        %v832 = vpop.f32.mrf.mxu0
        %v833 = vadd.f32 %v472, %v832
        %v834 = vpop.f32.mrf.mxu0
        %v835 = vadd.f32 %v472, %v834
        %836 = vmatprep.mubr.f32.mxu0 0.0
        %837 = vmatmul.mubr.f32.gmra.mxu0 %v540
        %v838 = vpop.f32.mrf.mxu0
        %v839 = vadd.f32 %v477, %v838
        %v840 = vpop.f32.mrf.mxu0
        %v841 = vadd.f32 %v477, %v840
        %842 = vmatprep.mubr.f32.mxu0 0.0
        %843 = vmatmul.mubr.f32.gmra.mxu0 %v543
        %v844 = vpop.f32.mrf.mxu0
        %v845 = vadd.f32 %v482, %v844
        %v846 = vpop.f32.mrf.mxu0
        %v847 = vadd.f32 %v482, %v846
        %848 = vmatprep.mubr.f32.mxu0 0.0
        %849 = vmatmul.mubr.f32.gmra.mxu0 %v546
        %v850 = vpop.f32.mrf.mxu0
        %v851 = vadd.f32 %v487, %v850
        %v852 = vpop.f32.mrf.mxu0
        %v853 = vadd.f32 %v487, %v852
        %854 = vmatprep.mubr.f32.mxu0 0.0
        %855 = vmatmul.mubr.f32.gmra.mxu0 %v549
        %v856 = vpop.f32.mrf.mxu0
        %v857 = vadd.f32 %v492, %v856
        %v858 = vpop.f32.mrf.mxu0
        %v859 = vadd.f32 %v492, %v858
        %860 = vmatprep.mubr.f32.mxu0 0.0
        %861 = vmatmul.mubr.f32.gmra.mxu0 %v552
        %v862 = vpop.f32.mrf.mxu0
        %v863 = vadd.f32 %v497, %v862
        %v864 = vpop.f32.mrf.mxu0
        %v865 = vadd.f32 %v497, %v864
        %866 = vmatprep.mubr.f32.mxu0 0.0
        %867 = vmatmul.mubr.f32.gmra.mxu0 %v555
        %v868 = vpop.f32.mrf.mxu0
        %v869 = vadd.f32 %v502, %v868
        %v870 = vpop.f32.mrf.mxu0
        %v871 = vadd.f32 %v502, %v870
        %872 = vmatprep.mubr.f32.mxu0 0.0
        %873 = vmatmul.mubr.f32.gmra.mxu0 %v558
        %v874 = vpop.f32.mrf.mxu0
        %v875 = vadd.f32 %v507, %v874
        %v876 = vpop.f32.mrf.mxu0
        %v877 = vadd.f32 %v507, %v876
        %878 = vmatprep.mubr.f32.mxu0 0.0
        %879 = vmatmul.mubr.f32.gmra.mxu0 %v561
        %v880 = vpop.f32.mrf.mxu0
        %v881 = vadd.f32 %v512, %v880
        %v882 = vpop.f32.mrf.mxu0
        %v883 = vadd.f32 %v512, %v882
        %884 = vdwg.mxu0
        %885 = vst [vmem:[%s358] sm:$0xff] %v630
        %886 = vst [vmem:[%s358 + $0x8] sm:$0xff] %v632
        %887 = vst [vmem:[%s358 + $0x10] sm:$0xff] %v791
        %888 = vst [vmem:[%s358 + $0x18] sm:$0xff] %v793
        %889 = vst [vmem:[%s358 + $0x20] sm:$0xff] %v636
        %890 = vst [vmem:[%s358 + $0x28] sm:$0xff] %v638
        %891 = vst [vmem:[%s358 + $0x30] sm:$0xff] %v797
        %892 = vst [vmem:[%s358 + $0x38] sm:$0xff] %v799
        %893 = vst [vmem:[%s358 + $0x40] sm:$0xff] %v642
        %894 = vst [vmem:[%s358 + $0x48] sm:$0xff] %v644
        %895 = vst [vmem:[%s358 + $0x50] sm:$0xff] %v803
        %896 = vst [vmem:[%s358 + $0x58] sm:$0xff] %v805
        %897 = vst [vmem:[%s358 + $0x60] sm:$0xff] %v648
        %898 = vst [vmem:[%s358 + $0x68] sm:$0xff] %v650
        %899 = vst [vmem:[%s358 + $0x70] sm:$0xff] %v809
        %900 = vst [vmem:[%s358 + $0x78] sm:$0xff] %v811
        %901 = vst [vmem:[%s358 + $0x80] sm:$0xff] %v654
        %902 = vst [vmem:[%s358 + $0x88] sm:$0xff] %v656
        %903 = vst [vmem:[%s358 + $0x90] sm:$0xff] %v815
        %904 = vst [vmem:[%s358 + $0x98] sm:$0xff] %v817
        %905 = vst [vmem:[%s358 + $0xa0] sm:$0xff] %v660
        %906 = vst [vmem:[%s358 + $0xa8] sm:$0xff] %v662
        %907 = vst [vmem:[%s358 + $0xb0] sm:$0xff] %v821
        %908 = vst [vmem:[%s358 + $0xb8] sm:$0xff] %v823
        %909 = vst [vmem:[%s358 + $0xc0] sm:$0xff] %v666
        %910 = vst [vmem:[%s358 + $0xc8] sm:$0xff] %v668
        %911 = vst [vmem:[%s358 + $0xd0] sm:$0xff] %v827
        %912 = vst [vmem:[%s358 + $0xd8] sm:$0xff] %v829
        %913 = vst [vmem:[%s358 + $0xe0] sm:$0xff] %v672
        %914 = vst [vmem:[%s358 + $0xe8] sm:$0xff] %v674
        %915 = vst [vmem:[%s358 + $0xf0] sm:$0xff] %v833
        %916 = vst [vmem:[%s358 + $0xf8] sm:$0xff] %v835
        %917 = vst [vmem:[%s358 + $0x100] sm:$0xff] %v678
        %918 = vst [vmem:[%s358 + $0x108] sm:$0xff] %v680
        %919 = vst [vmem:[%s358 + $0x110] sm:$0xff] %v839
        %920 = vst [vmem:[%s358 + $0x118] sm:$0xff] %v841
        %921 = vst [vmem:[%s358 + $0x120] sm:$0xff] %v684
        %922 = vst [vmem:[%s358 + $0x128] sm:$0xff] %v686
        %923 = vst [vmem:[%s358 + $0x130] sm:$0xff] %v845
        %924 = vst [vmem:[%s358 + $0x138] sm:$0xff] %v847
        %925 = vst [vmem:[%s358 + $0x140] sm:$0xff] %v690
        %926 = vst [vmem:[%s358 + $0x148] sm:$0xff] %v692
        %927 = vst [vmem:[%s358 + $0x150] sm:$0xff] %v851
        %928 = vst [vmem:[%s358 + $0x158] sm:$0xff] %v853
        %929 = vst [vmem:[%s358 + $0x160] sm:$0xff] %v696
        %930 = vst [vmem:[%s358 + $0x168] sm:$0xff] %v698
        %931 = vst [vmem:[%s358 + $0x170] sm:$0xff] %v857
        %932 = vst [vmem:[%s358 + $0x178] sm:$0xff] %v859
        %933 = vst [vmem:[%s358 + $0x180] sm:$0xff] %v702
        %934 = vst [vmem:[%s358 + $0x188] sm:$0xff] %v704
        %935 = vst [vmem:[%s358 + $0x190] sm:$0xff] %v863
        %936 = vst [vmem:[%s358 + $0x198] sm:$0xff] %v865
        %937 = vst [vmem:[%s358 + $0x1a0] sm:$0xff] %v708
        %938 = vst [vmem:[%s358 + $0x1a8] sm:$0xff] %v710
        %939 = vst [vmem:[%s358 + $0x1b0] sm:$0xff] %v869
        %940 = vst [vmem:[%s358 + $0x1b8] sm:$0xff] %v871
        %941 = vst [vmem:[%s358 + $0x1c0] sm:$0xff] %v714
        %942 = vst [vmem:[%s358 + $0x1c8] sm:$0xff] %v716
        %943 = vst [vmem:[%s358 + $0x1d0] sm:$0xff] %v875
        %944 = vst [vmem:[%s358 + $0x1d8] sm:$0xff] %v877
        %945 = vst [vmem:[%s358 + $0x1e0] sm:$0xff] %v720
        %946 = vst [vmem:[%s358 + $0x1e8] sm:$0xff] %v722
        %947 = vst [vmem:[%s358 + $0x1f0] sm:$0xff] %v881
        %948 = vst [vmem:[%s358 + $0x1f8] sm:$0xff] %v883
        %v949 = vld [vmem:[#allocation6] sm:$0x7]
        %v950 = vld [vmem:[#allocation7] sm:$0x7]
        %952 = vset.pattern.permute.xlu0 0
        %953 = vperm.xlu0 %952, %v950
        %v954 = vpop.permute.xlu0 %953
        %v957 = vsel %vm514, %v949, 0
        %959 = vmatprep.subr.mxu0 0.0
        %960 = vmatpush1.msra.mxu0 0.0
        %961 = vmatprep.subr.mxu0 0.0
        %962 = vmatpush1.msra.mxu0 0.0
        %963 = vmatprep.subr.mxu0 0.0
        %964 = vmatpush1.msra.mxu0 0.0
        %965 = vmatprep.subr.mxu0 0.0
        %966 = vmatpush1.msra.mxu0 0.0
        %967 = vmatprep.subr.mxu0 0.0
        %968 = vmatpush1.msra.mxu0 0.0
        %969 = vmatprep.subr.mxu0 0.0
        %970 = vmatpush1.msra.mxu0 0.0
        %971 = vmatprep.subr.mxu0 0.0
        %972 = vmatpush1.msra.mxu0 0.0
        %973 = vmatprep.subr.mxu0 0.0
        %974 = vmatpush1.msra.mxu0 0.0
        %975 = vmatprep.subr.mxu0 %v399
        %976 = vmatpush1.msra.mxu0 %v398
        %977 = vmatprep.subr.mxu0 %v395
        %978 = vmatpush1.msra.mxu0 %v394
        %979 = vmatprep.subr.mxu0 %v391
        %980 = vmatpush1.msra.mxu0 %v390
        %981 = vmatprep.subr.mxu0 %v387
        %982 = vmatpush1.msra.mxu0 %v386
        %983 = vmatprep.subr.mxu0 %v383
        %984 = vmatpush1.msra.mxu0 %v382
        %985 = vmatprep.subr.mxu0 %v379
        %986 = vmatpush1.msra.mxu0 %v378
        %987 = vmatprep.subr.mxu0 %v375
        %988 = vmatpush1.msra.mxu0 %v374
        %989 = vmatprep.subr.mxu0 %v371
        %990 = vmatpush1.msra.mxu0 %v370
        %991 = vmatprep.subr.mxu0 0.0
        %992 = vmatpush2.msra.mxu0 0.0
        %993 = vmatprep.subr.mxu0 0.0
        %994 = vmatpush2.msra.mxu0 0.0
        %995 = vmatprep.subr.mxu0 0.0
        %996 = vmatpush2.msra.mxu0 0.0
        %997 = vmatprep.subr.mxu0 0.0
        %998 = vmatpush2.msra.mxu0 0.0
        %999 = vmatprep.subr.mxu0 0.0
        %1000 = vmatpush2.msra.mxu0 0.0
        %1001 = vmatprep.subr.mxu0 0.0
        %1002 = vmatpush2.msra.mxu0 0.0
        %1003 = vmatprep.subr.mxu0 0.0
        %1004 = vmatpush2.msra.mxu0 0.0
        %1005 = vmatprep.subr.mxu0 0.0
        %1006 = vmatpush2.msra.mxu0 0.0
        %1007 = vmatprep.subr.mxu0 0.0
        %1008 = vmatpush2.msra.mxu0 0.0
        %1009 = vmatprep.subr.mxu0 0.0
        %1010 = vmatpush2.msra.mxu0 0.0
        %1011 = vmatprep.subr.mxu0 0.0
        %1012 = vmatpush2.msra.mxu0 0.0
        %1013 = vmatprep.subr.mxu0 0.0
        %1014 = vmatpush2.msra.mxu0 0.0
        %1015 = vmatprep.subr.mxu0 0.0
        %1016 = vmatpush2.msra.mxu0 0.0
        %1017 = vmatprep.subr.mxu0 0.0
        %1018 = vmatpush2.msra.mxu0 0.0
        %1019 = vmatprep.subr.mxu0 0.0
        %1020 = vmatpush2.msra.mxu0 0.0
        %1021 = vmatprep.subr.mxu0 0.0
        %1022 = vmatpush2.msra.mxu0 0.0
        %1023 = vmatprep.mubr.f32.mxu0 0.0
        %1024 = vmatmul.mubr.f32.gmra.mxu0 %v957
        %v1025 = vpop.f32.mrf.mxu0
        %v1026 = vadd.f32 %v954, %v1025
        %v1027 = vpop.f32.mrf.mxu0
        %v1028 = vadd.f32 %v954, %v1027
        %1029 = vdwg.mxu0
        %1030 = vmatprep.subr.mxu0 0.0
        %1031 = vmatpush1.msra.mxu0 0.0
        %1032 = vmatprep.subr.mxu0 0.0
        %1033 = vmatpush1.msra.mxu0 0.0
        %1034 = vmatprep.subr.mxu0 0.0
        %1035 = vmatpush1.msra.mxu0 0.0
        %1036 = vmatprep.subr.mxu0 0.0
        %1037 = vmatpush1.msra.mxu0 0.0
        %1038 = vmatprep.subr.mxu0 0.0
        %1039 = vmatpush1.msra.mxu0 0.0
        %1040 = vmatprep.subr.mxu0 0.0
        %1041 = vmatpush1.msra.mxu0 0.0
        %1042 = vmatprep.subr.mxu0 0.0
        %1043 = vmatpush1.msra.mxu0 0.0
        %1044 = vmatprep.subr.mxu0 0.0
        %1045 = vmatpush1.msra.mxu0 0.0
        %1046 = vmatprep.subr.mxu0 %v401
        %1047 = vmatpush1.msra.mxu0 %v400
        %1048 = vmatprep.subr.mxu0 %v397
        %1049 = vmatpush1.msra.mxu0 %v396
        %1050 = vmatprep.subr.mxu0 %v393
        %1051 = vmatpush1.msra.mxu0 %v392
        %1052 = vmatprep.subr.mxu0 %v389
        %1053 = vmatpush1.msra.mxu0 %v388
        %1054 = vmatprep.subr.mxu0 %v385
        %1055 = vmatpush1.msra.mxu0 %v384
        %1056 = vmatprep.subr.mxu0 %v381
        %1057 = vmatpush1.msra.mxu0 %v380
        %1058 = vmatprep.subr.mxu0 %v377
        %1059 = vmatpush1.msra.mxu0 %v376
        %1060 = vmatprep.subr.mxu0 %v373
        %1061 = vmatpush1.msra.mxu0 %v372
        %1062 = vmatprep.subr.mxu0 0.0
        %1063 = vmatpush2.msra.mxu0 0.0
        %1064 = vmatprep.subr.mxu0 0.0
        %1065 = vmatpush2.msra.mxu0 0.0
        %1066 = vmatprep.subr.mxu0 0.0
        %1067 = vmatpush2.msra.mxu0 0.0
        %1068 = vmatprep.subr.mxu0 0.0
        %1069 = vmatpush2.msra.mxu0 0.0
        %1070 = vmatprep.subr.mxu0 0.0
        %1071 = vmatpush2.msra.mxu0 0.0
        %1072 = vmatprep.subr.mxu0 0.0
        %1073 = vmatpush2.msra.mxu0 0.0
        %1074 = vmatprep.subr.mxu0 0.0
        %1075 = vmatpush2.msra.mxu0 0.0
        %1076 = vmatprep.subr.mxu0 0.0
        %1077 = vmatpush2.msra.mxu0 0.0
        %1078 = vmatprep.subr.mxu0 0.0
        %1079 = vmatpush2.msra.mxu0 0.0
        %1080 = vmatprep.subr.mxu0 0.0
        %1081 = vmatpush2.msra.mxu0 0.0
        %1082 = vmatprep.subr.mxu0 0.0
        %1083 = vmatpush2.msra.mxu0 0.0
        %1084 = vmatprep.subr.mxu0 0.0
        %1085 = vmatpush2.msra.mxu0 0.0
        %1086 = vmatprep.subr.mxu0 0.0
        %1087 = vmatpush2.msra.mxu0 0.0
        %1088 = vmatprep.subr.mxu0 0.0
        %1089 = vmatpush2.msra.mxu0 0.0
        %1090 = vmatprep.subr.mxu0 0.0
        %1091 = vmatpush2.msra.mxu0 0.0
        %1092 = vmatprep.subr.mxu0 0.0
        %1093 = vmatpush2.msra.mxu0 0.0
        %1094 = vmatprep.mubr.f32.mxu0 0.0
        %1095 = vmatmul.mubr.f32.gmra.mxu0 %v957
        %v1096 = vpop.f32.mrf.mxu0
        %v1097 = vadd.f32 %v954, %v1096
        %v1098 = vpop.f32.mrf.mxu0
        %v1099 = vadd.f32 %v954, %v1098
        %1100 = vdwg.mxu0
        %v1105 = vcombine.low %v1026, %v1028
        %v1106 = vcombine.low %v1097, %v1099
        %1109 = vst [vmem:[%s368] sm:$0x77] %v1105
        %1110 = vst [vmem:[%s368 + $0x8] sm:$0x77] %v1106
        %s1111 = smul.u32 4, %s26
        %p1112 = scmp.lt.s32.totalorder %s25, 1
        %s1113 = scalar_select %p1112, %s25, 1
        %p1114 = scmp.lt.s32.totalorder %s1111, 3
        %s1115 = scalar_select %p1114, %s1111, 3
        %s1116 = smul.addr %s1113, 64
        %s1117 = sadd.s32 %s1115, %s1116
        %s1118 = smul.addr %s1117, 8
        %s1119 = scalar_lea.vmem %s5, %s1118
        %s1120 = smul.u32 4, %s26
        %p1121 = scmp.lt.s32.totalorder %s25, 1
        %s1122 = scalar_select %p1121, %s25, 1
        %p1123 = scmp.lt.s32.totalorder %s1120, 3
        %s1124 = scalar_select %p1123, %s1120, 3
        %s1125 = smul.addr %s1122, 4
        %s1126 = sadd.s32 %s1124, %s1125
        %s1127 = smul.addr %s1126, 4
        %s1128 = scalar_lea.vmem %s6, %s1127
        // Predicated region
        $region57: #{_lambda_.1} parent=39 // pred_check
          %p1129 = pneg %p165
        $region58: #{_lambda_.1} parent=39 // pred_check_branch
          %1131 = sbr.rel (%p1129) target = $region60
        $region59: #{_lambda_.1} parent=39 // pred_region
          %s1132 = smul.u32 4, %s26
        $region60: #{_lambda_.1} parent=39 // pred_fallthru
          _
        // Predicated region
        $region61: #{_lambda_.1} parent=39 // pred_check
          %p1133 = pneg %p193
        $region62: #{_lambda_.1} parent=39 // pred_check_branch
          %1135 = sbr.rel (%p1133) target = $region64
        $region63: #{_lambda_.1} parent=39 // pred_region
          %s1136 = smul.u32 4, %s26
        $region64: #{_lambda_.1} parent=39 // pred_fallthru
          _
      $region40: #{_lambda_.1} parent=5 // pred_fallthru
        _
      %p1137 = scmp.le.s32.totalorder 2, %s16
      // Predicated region
      $region65: #{_lambda_.1} parent=5 // pred_check
        %p1138 = pneg %p1137
      $region66: #{_lambda_.1} parent=5 // pred_check_branch
        %1140 = sbr.rel (%p1138) target = $region68
      $region67: #{_lambda_.1} parent=5 // pred_region
        %s1141 = ssub.s32 %s16, 2
        // Predicated region
        $region69: #{_lambda_.1} parent=67 // pred_check
          %p1142 = pneg %p171
        $region70: #{_lambda_.1} parent=67 // pred_check_branch
          %1144 = sbr.rel (%p1142) target = $region72
        $region71: #{_lambda_.1} parent=67 // pred_region
          %s1145 = smul.u32 4, %s28
          %p1146 = scmp.lt.s32.totalorder %s27, 1
          %s1147 = scalar_select %p1146, %s27, 1
          %p1148 = scmp.lt.s32.totalorder %s1145, 3
          %s1149 = scalar_select %p1148, %s1145, 3
          %s1150 = smul.addr %s1147, 64
          %s1151 = sadd.s32 %s1149, %s1150
          %s1152 = smul.addr %s1151, 8
          %s1153 = scalar_lea.vmem %s5, %s1152
        $region72: #{_lambda_.1} parent=67 // pred_fallthru
          _
        // Predicated region
        $region73: #{_lambda_.1} parent=67 // pred_check
          %p1154 = pneg %p199
        $region74: #{_lambda_.1} parent=67 // pred_check_branch
          %1156 = sbr.rel (%p1154) target = $region76
        $region75: #{_lambda_.1} parent=67 // pred_region
          %s1157 = smul.u32 4, %s28
          %p1158 = scmp.lt.s32.totalorder %s27, 1
          %s1159 = scalar_select %p1158, %s27, 1
          %p1160 = scmp.lt.s32.totalorder %s1157, 3
          %s1161 = scalar_select %p1160, %s1157, 3
          %s1162 = smul.addr %s1159, 4
          %s1163 = sadd.s32 %s1161, %s1162
          %s1164 = smul.addr %s1163, 4
          %s1165 = scalar_lea.vmem %s6, %s1164
        $region76: #{_lambda_.1} parent=67 // pred_fallthru
          _
      $region68: #{_lambda_.1} parent=5 // pred_fallthru
        _
    $region6: #{_lambda_.1} parent=1 // loop_footer
      %s20 = sadd.s32 1, %s16
    $region7: #{_lambda_.1} parent=1 // loop_footer_branch
      %15 = sbr.rel target = $region3
    $region8: #{_lambda_.1} parent=1 // loop_exit
      _
    %1166 = vsyncpa [#allocation3], 1
    %s1167 = scalar_lea.sflag [#allocation3], 1
    %1168 = vsyncpa %s1167, 1
    %1169 = vsyncpa [#allocation5], 1
    %1170 = vsyncpa [#allocation8], 1

</llo_original>
